<compile_context>
chip_gen: v5e
topology: v5e:2x2
jax: 0.10.0
libtpu: 0.0.40
codegen_flags: <defaults>
</compile_context>

<pallas_src>
import numpy as np
import jax
import jax.numpy as jnp
from jax.experimental import pallas as pl
from jax.experimental.pallas import tpu as pltpu

_C1 = 0.01 ** 2
_C2 = 0.03 ** 2


def _gaussian_window(window_size, sigma=1.5):
    x = np.arange(window_size, dtype=np.float64)
    g = np.exp(-((x - window_size // 2) ** 2) / (2.0 * sigma ** 2))
    g = g / g.sum()
    return g.astype(np.float32)


def _make_rpsl_kernel(compute_dtype):
    """Builds the per-pair SSIM-loss kernel.

    Per grid step (one shuffled patch pair):
      src_ref, tar_ref : (C*H, W)  folded patches (float32)
      a_ref            : (OH, H)   Gaussian band matrix along H (pad baked in)
      b_ref            : (W, OW)   Gaussian band matrix along W (pad baked in)
      out_ref          : (1, 1)    SMEM scalar: 1 - mean(SSIM map)

    The separable strided Gaussian conv of the stacked tensor
    [src, tar, src^2, tar^2, src*tar] is computed as ONE large
    (5*C*H, W) @ (W, OW) MXU matmul followed by 5*C tiny (OH, H) @ (H, OW)
    matmuls (A applied per block — no kron'd block-diagonal operand).
    """

    def kernel(src_ref, tar_ref, a_ref, b_ref, out_ref):
        s = src_ref[...]                          # (C*H, W) float32
        t = tar_ref[...]
        a = a_ref[...].astype(compute_dtype)      # (OH, H)
        b = b_ref[...].astype(compute_dtype)      # (W, OW)

        oh, h = a_ref.shape
        ow = b_ref.shape[1]
        n_ch = s.shape[0] // h                    # C (static Python int)

        # Stat stack -> one big MXU contraction along W.
        x2 = jnp.concatenate([s, t, s * s, t * t, s * t],
                             axis=0).astype(compute_dtype)        # (5*C*H, W)
        y = jnp.dot(x2, b, preferred_element_type=jnp.float32)    # (5*C*H, OW)
        y = y.astype(compute_dtype)

        inv_count = 1.0 / float(n_ch * oh * ow)
        acc = jnp.zeros((), jnp.float32)
        for c in range(n_ch):                     # static unroll over channels
            def stat(j, _c=c):
                r0 = (j * n_ch + _c) * h          # block (stat j, channel c)
                return jnp.dot(a, y[r0:r0 + h, :],
                               preferred_element_type=jnp.float32)  # (OH, OW)

            mu1, mu2 = stat(0), stat(1)
            e11, e22, e12 = stat(2), stat(3), stat(4)

            mu1_sq = mu1 * mu1
            mu2_sq = mu2 * mu2
            mu1_mu2 = mu1 * mu2
            num = (2.0 * mu1_mu2 + _C1) * (2.0 * (e12 - mu1_mu2) + _C2)
            den = ((mu1_sq + mu2_sq + _C1)
                   * ((e11 - mu1_sq) + (e22 - mu2_sq) + _C2))
            acc = acc + jnp.sum(num / den)        # exact divide for f32 parity

        out_ref[0, 0] = 1.0 - acc * inv_count

    return kernel


class RPSL:
    """JAX/Pallas port of the PyTorch RPSL module."""

    def __init__(self, kernel_size=4, stride=4, repeat_time=10,
                 patch_height=64, patch_width=64, channels=3,
                 use_bf16_matmul=False):
        assert kernel_size == stride, "band-matrix folding assumes kernel_size == stride"
        self.k = kernel_size
        self.s = stride
        self.repeat_time = repeat_time
        self.ph = patch_height
        self.pw = patch_width
        self.c = channels
        self.pad = (kernel_size - 1) // 2
        self._g = _gaussian_window(kernel_size)   # deterministic "weights"

        a, b = self._build_downsample_mats()
        self._a = jnp.asarray(a)                  # (OH, H)   ~a few KB
        self._b = jnp.asarray(b)                  # (W, OW)
        self._kernel = _make_rpsl_kernel(
            jnp.bfloat16 if use_bf16_matmul else jnp.float32)
        self._fwd_batched = jax.jit(self._forward_batched)

    def _build_downsample_mats(self):
        """Band matrices with the zero-padding offset baked in.

        A[o, r] = g[j] for r = o*s - p + j (0 <= r < H), so A @ img @ B equals
        the zero-padded, strided Gaussian conv — no explicit pad/crop round trip.
        """
        k, s, p, g = self.k, self.s, self.pad, self._g
        H = self.ph
        W = self.pw * self.repeat_time
        OH = (H + 2 * p - k) // s + 1
        OW = (W + 2 * p - k) // s + 1

        A = np.zeros((OH, H), np.float32)
        for o in range(OH):
            for j in range(k):
                r = o * s - p + j
                if 0 <= r < H:
                    A[o, r] = g[j]

        B = np.zeros((W, OW), np.float32)
        for o in range(OW):
            for j in range(k):
                col = o * s - p + j
                if 0 <= col < W:
                    B[col, o] = g[j]
        return A, B

    def _shuffle_and_fold(self, key, src_vec, tar_vec):
        """Per pair: arange + (R-1) random perms, gather, fold to (C*H, W_total)."""
        n = self.ph * self.pw
        R = self.repeat_time
        base = jnp.arange(n, dtype=jnp.int32)
        if R > 1:
            keys = jax.random.split(key, R - 1)
            perms = jax.vmap(lambda kk: jax.random.permutation(kk, n))(keys)
            res_index = jnp.concatenate(
                [base[None, :], perms.astype(jnp.int32)], axis=0).reshape(-1)
        else:
            res_index = base
        w_total = self.pw * R
        # permute(1,0).reshape(1, C, H, W) collapsed straight to (C*H, W).
        src2d = src_vec[res_index].T.reshape(self.c * self.ph, w_total)
        tar2d = tar_vec[res_index].T.reshape(self.c * self.ph, w_total)
        return src2d.astype(jnp.float32), tar2d.astype(jnp.float32)

    def _forward_batched(self, keys, src_vecs, tar_vecs):
        src2d, tar2d = jax.vmap(self._shuffle_and_fold)(keys, src_vecs, tar_vecs)
        n_pairs = src2d.shape[0]
        ch_rows = self.c * self.ph
        w_total = self.pw * self.repeat_time
        oh = self._a.shape[0]
        ow = self._b.shape[1]

        losses = pl.pallas_call(
            self._kernel,
            out_shape=jax.ShapeDtypeStruct((n_pairs, 1), jnp.float32),
            grid=(n_pairs,),
            in_specs=[
                pl.BlockSpec((None, ch_rows, w_total), lambda i: (i, 0, 0)),
                pl.BlockSpec((None, ch_rows, w_total), lambda i: (i, 0, 0)),
                # A / B: constant block index -> DMA'd once, reused every step.
                pl.BlockSpec((oh, self.ph), lambda i: (0, 0)),
                pl.BlockSpec((w_total, ow), lambda i: (0, 0)),
            ],
            out_specs=pl.BlockSpec((1, 1), lambda i: (i, 0),
                                   memory_space=pltpu.MemorySpace.SMEM),
            compiler_params=pltpu.CompilerParams(
                dimension_semantics=("parallel",),
                vmem_limit_bytes=32 * 1024 * 1024),
        )(src2d, tar2d, self._a, self._b)
        return losses[:, 0]

    def forward_batched(self, key, src_vecs, tar_vecs):
        """Many independent patch pairs in one pallas_call (amortizes launch /
        prologue overhead; uses both v7x TensorCores via the parallel grid)."""
        n_pairs = src_vecs.shape[0]
        keys = jax.random.split(key, n_pairs)
        return self._fwd_batched(keys, src_vecs, tar_vecs)

    def __call__(self, key, src_vec, tar_vec):
        keys = jnp.expand_dims(key, 0)
        return self._fwd_batched(keys, src_vec[None], tar_vec[None])[0]


def _reference_loss(rpsl, src2d, tar2d):
    """Pure-JAX mirror of the kernel math (self-test only)."""
    A, B, C, H = rpsl._a, rpsl._b, rpsl.c, rpsl.ph

    def down(img2d):
        x = img2d.reshape(C, H, -1)
        return jnp.einsum('oh,chw,wp->cop', A, x, B)

    mu1, mu2 = down(src2d), down(tar2d)
    e11 = down(src2d * src2d)
    e22 = down(tar2d * tar2d)
    e12 = down(src2d * tar2d)
    mu1_sq, mu2_sq, mu1_mu2 = mu1 * mu1, mu2 * mu2, mu1 * mu2
    num = (2.0 * mu1_mu2 + _C1) * (2.0 * (e12 - mu1_mu2) + _C2)
    den = (mu1_sq + mu2_sq + _C1) * ((e11 - mu1_sq) + (e22 - mu2_sq) + _C2)
    return 1.0 - jnp.mean(num / den)


if __name__ == "__main__":
    # Small shapes consistent with the module: patch 16x16, 3 channels, 4 repeats.
    patch_h, patch_w, repeat = 16, 16, 4
    n = patch_h * patch_w                      # 256 pixels per virtual patch
    key = jax.random.PRNGKey(0)
    k_src, k_tar, k_perm, k_batch = jax.random.split(key, 4)
    src_vec = jax.random.uniform(k_src, (n, 3), dtype=jnp.float32)
    tar_vec = jax.random.uniform(k_tar, (n, 3), dtype=jnp.float32)

    rpsl = RPSL(kernel_size=4, stride=4, repeat_time=repeat,
                patch_height=patch_h, patch_width=patch_w)

    # Single-pair call (module-parity path).
    loss = rpsl(k_perm, src_vec, tar_vec)
    jax.block_until_ready(loss)
    assert loss.shape == () and bool(jnp.isfinite(loss))

    # Cross-check against a pure-JAX reference on the same shuffle.
    src2d_ref, tar2d_ref = rpsl._shuffle_and_fold(k_perm, src_vec, tar_vec)
    ref = _reference_loss(rpsl, src2d_ref, tar2d_ref)
    assert abs(float(loss) - float(ref)) < 2e-3, (float(loss), float(ref))

    # Batched path: one pallas_call, grid over pairs ("parallel" axis).
    src_b = jnp.stack([src_vec, 0.5 * src_vec + 0.25])
    tar_b = jnp.stack([tar_vec, tar_vec])
    losses = rpsl.forward_batched(k_batch, src_b, tar_b)
    jax.block_until_ready(losses)
    assert losses.shape == (2,) and bool(jnp.all(jnp.isfinite(losses)))

    print("KERNEL_OK")
</pallas_src>

<mosaic_0001>
module attributes {stable_mosaic.version = 11 : i64} {
  func.func @kernel(%arg0: i32, %arg1: memref<1x48x64xf32, #tpu.memory_space<vmem>>, %arg2: memref<1x48x64xf32, #tpu.memory_space<vmem>>, %arg3: memref<4x16xf32, #tpu.memory_space<vmem>>, %arg4: memref<64x16xf32, #tpu.memory_space<vmem>>, %arg5: memref<1x1xf32, #tpu.memory_space<smem>>) attributes {dimension_semantics = [#tpu.dimension_semantics<parallel>], iteration_bounds = array<i64: 1>, scalar_prefetch = 0 : i64, scratch_operands = 0 : i64, tpu.core_type = #tpu.core_type<tc>, window_params = [{transform_indices = @transform_0, window_bounds = array<i64: 1, 48, 64>}, {transform_indices = @transform_1, window_bounds = array<i64: 1, 48, 64>}, {pipeline_mode = #tpu.pipeline_mode<synchronous>, transform_indices = @transform_2, window_bounds = array<i64: 4, 16>}, {pipeline_mode = #tpu.pipeline_mode<synchronous>, transform_indices = @transform_3, window_bounds = array<i64: 64, 16>}, {transform_indices = @transform_4, window_bounds = array<i64: 1, 1>}]} {
    %c0 = arith.constant 0 : index
    %c0_0 = arith.constant 0 : index
    %c0_1 = arith.constant 0 : index
    %0 = vector.load %arg1[%c0, %c0_0, %c0_1] : memref<1x48x64xf32, #tpu.memory_space<vmem>>, vector<1x48x64xf32>
    %1 = vector.shape_cast %0 : vector<1x48x64xf32> to vector<48x64xf32>
    %c0_2 = arith.constant 0 : index
    %c0_3 = arith.constant 0 : index
    %c0_4 = arith.constant 0 : index
    %2 = vector.load %arg2[%c0_2, %c0_3, %c0_4] : memref<1x48x64xf32, #tpu.memory_space<vmem>>, vector<1x48x64xf32>
    %3 = vector.shape_cast %2 : vector<1x48x64xf32> to vector<48x64xf32>
    %c0_5 = arith.constant 0 : index
    %c0_6 = arith.constant 0 : index
    %4 = vector.load %arg3[%c0_5, %c0_6] : memref<4x16xf32, #tpu.memory_space<vmem>>, vector<4x16xf32>
    %c0_7 = arith.constant 0 : index
    %c0_8 = arith.constant 0 : index
    %5 = vector.load %arg4[%c0_7, %c0_8] : memref<64x16xf32, #tpu.memory_space<vmem>>, vector<64x16xf32>
    %6 = arith.mulf %1, %1 : vector<48x64xf32>
    %7 = arith.mulf %3, %3 : vector<48x64xf32>
    %8 = arith.mulf %1, %3 : vector<48x64xf32>
    %9 = tpu.concatenate %1, %3, %6, %7, %8 in 0 : vector<48x64xf32>, vector<48x64xf32>, vector<48x64xf32>, vector<48x64xf32>, vector<48x64xf32> -> vector<240x64xf32>
    %cst = arith.constant dense<0.000000e+00> : vector<240x16xf32>
    %10 = tpu.matmul %9, %5, %cst {dimension_numbers = #tpu.dot_dimension_numbers<[1], [0], [0], [1], [0, 0, 1, 1], [], []>} : vector<240x64xf32>, vector<64x16xf32>, vector<240x16xf32> -> vector<240x16xf32>
    %11 = vector.extract_strided_slice %10 {offsets = [0, 0], sizes = [16, 16], strides = [1, 1]} : vector<240x16xf32> to vector<16x16xf32>
    %cst_9 = arith.constant dense<0.000000e+00> : vector<4x16xf32>
    %12 = tpu.matmul %4, %11, %cst_9 {dimension_numbers = #tpu.dot_dimension_numbers<[1], [0], [0], [1], [0, 0, 1, 1], [], []>} : vector<4x16xf32>, vector<16x16xf32>, vector<4x16xf32> -> vector<4x16xf32>
    %13 = vector.extract_strided_slice %10 {offsets = [48, 0], sizes = [16, 16], strides = [1, 1]} : vector<240x16xf32> to vector<16x16xf32>
    %cst_10 = arith.constant dense<0.000000e+00> : vector<4x16xf32>
    %14 = tpu.matmul %4, %13, %cst_10 {dimension_numbers = #tpu.dot_dimension_numbers<[1], [0], [0], [1], [0, 0, 1, 1], [], []>} : vector<4x16xf32>, vector<16x16xf32>, vector<4x16xf32> -> vector<4x16xf32>
    %15 = vector.extract_strided_slice %10 {offsets = [96, 0], sizes = [16, 16], strides = [1, 1]} : vector<240x16xf32> to vector<16x16xf32>
    %cst_11 = arith.constant dense<0.000000e+00> : vector<4x16xf32>
    %16 = tpu.matmul %4, %15, %cst_11 {dimension_numbers = #tpu.dot_dimension_numbers<[1], [0], [0], [1], [0, 0, 1, 1], [], []>} : vector<4x16xf32>, vector<16x16xf32>, vector<4x16xf32> -> vector<4x16xf32>
    %17 = vector.extract_strided_slice %10 {offsets = [144, 0], sizes = [16, 16], strides = [1, 1]} : vector<240x16xf32> to vector<16x16xf32>
    %cst_12 = arith.constant dense<0.000000e+00> : vector<4x16xf32>
    %18 = tpu.matmul %4, %17, %cst_12 {dimension_numbers = #tpu.dot_dimension_numbers<[1], [0], [0], [1], [0, 0, 1, 1], [], []>} : vector<4x16xf32>, vector<16x16xf32>, vector<4x16xf32> -> vector<4x16xf32>
    %19 = vector.extract_strided_slice %10 {offsets = [192, 0], sizes = [16, 16], strides = [1, 1]} : vector<240x16xf32> to vector<16x16xf32>
    %cst_13 = arith.constant dense<0.000000e+00> : vector<4x16xf32>
    %20 = tpu.matmul %4, %19, %cst_13 {dimension_numbers = #tpu.dot_dimension_numbers<[1], [0], [0], [1], [0, 0, 1, 1], [], []>} : vector<4x16xf32>, vector<16x16xf32>, vector<4x16xf32> -> vector<4x16xf32>
    %21 = arith.mulf %12, %12 : vector<4x16xf32>
    %22 = arith.mulf %14, %14 : vector<4x16xf32>
    %23 = arith.mulf %12, %14 : vector<4x16xf32>
    %cst_14 = arith.constant 2.000000e+00 : f32
    %24 = vector.broadcast %cst_14 : f32 to vector<4x16xf32>
    %25 = arith.mulf %24, %23 : vector<4x16xf32>
    %cst_15 = arith.constant 9.99999974E-5 : f32
    %26 = vector.broadcast %cst_15 : f32 to vector<4x16xf32>
    %27 = arith.addf %25, %26 : vector<4x16xf32>
    %28 = arith.subf %20, %23 : vector<4x16xf32>
    %cst_16 = arith.constant 2.000000e+00 : f32
    %29 = vector.broadcast %cst_16 : f32 to vector<4x16xf32>
    %30 = arith.mulf %29, %28 : vector<4x16xf32>
    %cst_17 = arith.constant 8.99999984E-4 : f32
    %31 = vector.broadcast %cst_17 : f32 to vector<4x16xf32>
    %32 = arith.addf %30, %31 : vector<4x16xf32>
    %33 = arith.mulf %27, %32 : vector<4x16xf32>
    %34 = arith.addf %21, %22 : vector<4x16xf32>
    %cst_18 = arith.constant 9.99999974E-5 : f32
    %35 = vector.broadcast %cst_18 : f32 to vector<4x16xf32>
    %36 = arith.addf %34, %35 : vector<4x16xf32>
    %37 = arith.subf %16, %21 : vector<4x16xf32>
    %38 = arith.subf %18, %22 : vector<4x16xf32>
    %39 = arith.addf %37, %38 : vector<4x16xf32>
    %cst_19 = arith.constant 8.99999984E-4 : f32
    %40 = vector.broadcast %cst_19 : f32 to vector<4x16xf32>
    %41 = arith.addf %39, %40 : vector<4x16xf32>
    %42 = arith.mulf %36, %41 : vector<4x16xf32>
    %43 = arith.divf %33, %42 : vector<4x16xf32>
    %44 = vector.shape_cast %43 : vector<4x16xf32> to vector<1x4x16xf32>
    %cst_20 = arith.constant dense<0.000000e+00> : vector<1xf32>
    %45 = vector.multi_reduction <add>, %44, %cst_20 [1, 2] : vector<1x4x16xf32> to vector<1xf32>
    %46 = vector.shape_cast %45 : vector<1xf32> to vector<1x1x1xf32>
    %47 = vector.extract %46[0, 0, 0] : f32 from vector<1x1x1xf32>
    %cst_21 = arith.constant 0.000000e+00 : f32
    %48 = arith.addf %cst_21, %47 : f32
    %49 = vector.extract_strided_slice %10 {offsets = [16, 0], sizes = [16, 16], strides = [1, 1]} : vector<240x16xf32> to vector<16x16xf32>
    %cst_22 = arith.constant dense<0.000000e+00> : vector<4x16xf32>
    %50 = tpu.matmul %4, %49, %cst_22 {dimension_numbers = #tpu.dot_dimension_numbers<[1], [0], [0], [1], [0, 0, 1, 1], [], []>} : vector<4x16xf32>, vector<16x16xf32>, vector<4x16xf32> -> vector<4x16xf32>
    %51 = vector.extract_strided_slice %10 {offsets = [64, 0], sizes = [16, 16], strides = [1, 1]} : vector<240x16xf32> to vector<16x16xf32>
    %cst_23 = arith.constant dense<0.000000e+00> : vector<4x16xf32>
    %52 = tpu.matmul %4, %51, %cst_23 {dimension_numbers = #tpu.dot_dimension_numbers<[1], [0], [0], [1], [0, 0, 1, 1], [], []>} : vector<4x16xf32>, vector<16x16xf32>, vector<4x16xf32> -> vector<4x16xf32>
    %53 = vector.extract_strided_slice %10 {offsets = [112, 0], sizes = [16, 16], strides = [1, 1]} : vector<240x16xf32> to vector<16x16xf32>
    %cst_24 = arith.constant dense<0.000000e+00> : vector<4x16xf32>
    %54 = tpu.matmul %4, %53, %cst_24 {dimension_numbers = #tpu.dot_dimension_numbers<[1], [0], [0], [1], [0, 0, 1, 1], [], []>} : vector<4x16xf32>, vector<16x16xf32>, vector<4x16xf32> -> vector<4x16xf32>
    %55 = vector.extract_strided_slice %10 {offsets = [160, 0], sizes = [16, 16], strides = [1, 1]} : vector<240x16xf32> to vector<16x16xf32>
    %cst_25 = arith.constant dense<0.000000e+00> : vector<4x16xf32>
    %56 = tpu.matmul %4, %55, %cst_25 {dimension_numbers = #tpu.dot_dimension_numbers<[1], [0], [0], [1], [0, 0, 1, 1], [], []>} : vector<4x16xf32>, vector<16x16xf32>, vector<4x16xf32> -> vector<4x16xf32>
    %57 = vector.extract_strided_slice %10 {offsets = [208, 0], sizes = [16, 16], strides = [1, 1]} : vector<240x16xf32> to vector<16x16xf32>
    %cst_26 = arith.constant dense<0.000000e+00> : vector<4x16xf32>
    %58 = tpu.matmul %4, %57, %cst_26 {dimension_numbers = #tpu.dot_dimension_numbers<[1], [0], [0], [1], [0, 0, 1, 1], [], []>} : vector<4x16xf32>, vector<16x16xf32>, vector<4x16xf32> -> vector<4x16xf32>
    %59 = arith.mulf %50, %50 : vector<4x16xf32>
    %60 = arith.mulf %52, %52 : vector<4x16xf32>
    %61 = arith.mulf %50, %52 : vector<4x16xf32>
    %cst_27 = arith.constant 2.000000e+00 : f32
    %62 = vector.broadcast %cst_27 : f32 to vector<4x16xf32>
    %63 = arith.mulf %62, %61 : vector<4x16xf32>
    %cst_28 = arith.constant 9.99999974E-5 : f32
    %64 = vector.broadcast %cst_28 : f32 to vector<4x16xf32>
    %65 = arith.addf %63, %64 : vector<4x16xf32>
    %66 = arith.subf %58, %61 : vector<4x16xf32>
    %cst_29 = arith.constant 2.000000e+00 : f32
    %67 = vector.broadcast %cst_29 : f32 to vector<4x16xf32>
    %68 = arith.mulf %67, %66 : vector<4x16xf32>
    %cst_30 = arith.constant 8.99999984E-4 : f32
    %69 = vector.broadcast %cst_30 : f32 to vector<4x16xf32>
    %70 = arith.addf %68, %69 : vector<4x16xf32>
    %71 = arith.mulf %65, %70 : vector<4x16xf32>
    %72 = arith.addf %59, %60 : vector<4x16xf32>
    %cst_31 = arith.constant 9.99999974E-5 : f32
    %73 = vector.broadcast %cst_31 : f32 to vector<4x16xf32>
    %74 = arith.addf %72, %73 : vector<4x16xf32>
    %75 = arith.subf %54, %59 : vector<4x16xf32>
    %76 = arith.subf %56, %60 : vector<4x16xf32>
    %77 = arith.addf %75, %76 : vector<4x16xf32>
    %cst_32 = arith.constant 8.99999984E-4 : f32
    %78 = vector.broadcast %cst_32 : f32 to vector<4x16xf32>
    %79 = arith.addf %77, %78 : vector<4x16xf32>
    %80 = arith.mulf %74, %79 : vector<4x16xf32>
    %81 = arith.divf %71, %80 : vector<4x16xf32>
    %82 = vector.shape_cast %81 : vector<4x16xf32> to vector<1x4x16xf32>
    %cst_33 = arith.constant dense<0.000000e+00> : vector<1xf32>
    %83 = vector.multi_reduction <add>, %82, %cst_33 [1, 2] : vector<1x4x16xf32> to vector<1xf32>
    %84 = vector.shape_cast %83 : vector<1xf32> to vector<1x1x1xf32>
    %85 = vector.extract %84[0, 0, 0] : f32 from vector<1x1x1xf32>
    %86 = arith.addf %48, %85 : f32
    %87 = vector.extract_strided_slice %10 {offsets = [32, 0], sizes = [16, 16], strides = [1, 1]} : vector<240x16xf32> to vector<16x16xf32>
    %cst_34 = arith.constant dense<0.000000e+00> : vector<4x16xf32>
    %88 = tpu.matmul %4, %87, %cst_34 {dimension_numbers = #tpu.dot_dimension_numbers<[1], [0], [0], [1], [0, 0, 1, 1], [], []>} : vector<4x16xf32>, vector<16x16xf32>, vector<4x16xf32> -> vector<4x16xf32>
    %89 = vector.extract_strided_slice %10 {offsets = [80, 0], sizes = [16, 16], strides = [1, 1]} : vector<240x16xf32> to vector<16x16xf32>
    %cst_35 = arith.constant dense<0.000000e+00> : vector<4x16xf32>
    %90 = tpu.matmul %4, %89, %cst_35 {dimension_numbers = #tpu.dot_dimension_numbers<[1], [0], [0], [1], [0, 0, 1, 1], [], []>} : vector<4x16xf32>, vector<16x16xf32>, vector<4x16xf32> -> vector<4x16xf32>
    %91 = vector.extract_strided_slice %10 {offsets = [128, 0], sizes = [16, 16], strides = [1, 1]} : vector<240x16xf32> to vector<16x16xf32>
    %cst_36 = arith.constant dense<0.000000e+00> : vector<4x16xf32>
    %92 = tpu.matmul %4, %91, %cst_36 {dimension_numbers = #tpu.dot_dimension_numbers<[1], [0], [0], [1], [0, 0, 1, 1], [], []>} : vector<4x16xf32>, vector<16x16xf32>, vector<4x16xf32> -> vector<4x16xf32>
    %93 = vector.extract_strided_slice %10 {offsets = [176, 0], sizes = [16, 16], strides = [1, 1]} : vector<240x16xf32> to vector<16x16xf32>
    %cst_37 = arith.constant dense<0.000000e+00> : vector<4x16xf32>
    %94 = tpu.matmul %4, %93, %cst_37 {dimension_numbers = #tpu.dot_dimension_numbers<[1], [0], [0], [1], [0, 0, 1, 1], [], []>} : vector<4x16xf32>, vector<16x16xf32>, vector<4x16xf32> -> vector<4x16xf32>
    %95 = vector.extract_strided_slice %10 {offsets = [224, 0], sizes = [16, 16], strides = [1, 1]} : vector<240x16xf32> to vector<16x16xf32>
    %cst_38 = arith.constant dense<0.000000e+00> : vector<4x16xf32>
    %96 = tpu.matmul %4, %95, %cst_38 {dimension_numbers = #tpu.dot_dimension_numbers<[1], [0], [0], [1], [0, 0, 1, 1], [], []>} : vector<4x16xf32>, vector<16x16xf32>, vector<4x16xf32> -> vector<4x16xf32>
    %97 = arith.mulf %88, %88 : vector<4x16xf32>
    %98 = arith.mulf %90, %90 : vector<4x16xf32>
    %99 = arith.mulf %88, %90 : vector<4x16xf32>
    %cst_39 = arith.constant 2.000000e+00 : f32
    %100 = vector.broadcast %cst_39 : f32 to vector<4x16xf32>
    %101 = arith.mulf %100, %99 : vector<4x16xf32>
    %cst_40 = arith.constant 9.99999974E-5 : f32
    %102 = vector.broadcast %cst_40 : f32 to vector<4x16xf32>
    %103 = arith.addf %101, %102 : vector<4x16xf32>
    %104 = arith.subf %96, %99 : vector<4x16xf32>
    %cst_41 = arith.constant 2.000000e+00 : f32
    %105 = vector.broadcast %cst_41 : f32 to vector<4x16xf32>
    %106 = arith.mulf %105, %104 : vector<4x16xf32>
    %cst_42 = arith.constant 8.99999984E-4 : f32
    %107 = vector.broadcast %cst_42 : f32 to vector<4x16xf32>
    %108 = arith.addf %106, %107 : vector<4x16xf32>
    %109 = arith.mulf %103, %108 : vector<4x16xf32>
    %110 = arith.addf %97, %98 : vector<4x16xf32>
    %cst_43 = arith.constant 9.99999974E-5 : f32
    %111 = vector.broadcast %cst_43 : f32 to vector<4x16xf32>
    %112 = arith.addf %110, %111 : vector<4x16xf32>
    %113 = arith.subf %92, %97 : vector<4x16xf32>
    %114 = arith.subf %94, %98 : vector<4x16xf32>
    %115 = arith.addf %113, %114 : vector<4x16xf32>
    %cst_44 = arith.constant 8.99999984E-4 : f32
    %116 = vector.broadcast %cst_44 : f32 to vector<4x16xf32>
    %117 = arith.addf %115, %116 : vector<4x16xf32>
    %118 = arith.mulf %112, %117 : vector<4x16xf32>
    %119 = arith.divf %109, %118 : vector<4x16xf32>
    %120 = vector.shape_cast %119 : vector<4x16xf32> to vector<1x4x16xf32>
    %cst_45 = arith.constant dense<0.000000e+00> : vector<1xf32>
    %121 = vector.multi_reduction <add>, %120, %cst_45 [1, 2] : vector<1x4x16xf32> to vector<1xf32>
    %122 = vector.shape_cast %121 : vector<1xf32> to vector<1x1x1xf32>
    %123 = vector.extract %122[0, 0, 0] : f32 from vector<1x1x1xf32>
    %124 = arith.addf %86, %123 : f32
    %cst_46 = arith.constant 0.00520833349 : f32
    %125 = arith.mulf %124, %cst_46 : f32
    %cst_47 = arith.constant 1.000000e+00 : f32
    %126 = arith.subf %cst_47, %125 : f32
    %c0_48 = arith.constant 0 : index
    %c0_49 = arith.constant 0 : index
    %127 = memref.load %arg5[%c0_48, %c0_49] : memref<1x1xf32, #tpu.memory_space<smem>>
    memref.store %126, %arg5[%c0_48, %c0_49] : memref<1x1xf32, #tpu.memory_space<smem>>
    return
  }
  func.func @transform_0(%arg0: i32) -> (i32, i32, i32) {
    %c0_i32 = arith.constant 0 : i32
    %c0_i32_0 = arith.constant 0 : i32
    %c0_i32_1 = arith.constant 0 : i32
    return %arg0, %c0_i32, %c0_i32_0 : i32, i32, i32
  }
  func.func @transform_1(%arg0: i32) -> (i32, i32, i32) {
    %c0_i32 = arith.constant 0 : i32
    %c0_i32_0 = arith.constant 0 : i32
    %c0_i32_1 = arith.constant 0 : i32
    return %arg0, %c0_i32, %c0_i32_0 : i32, i32, i32
  }
  func.func @transform_2(%arg0: i32) -> (i32, i32) {
    %c0_i32 = arith.constant 0 : i32
    %c0_i32_0 = arith.constant 0 : i32
    %c0_i32_1 = arith.constant 0 : i32
    return %c0_i32, %c0_i32_0 : i32, i32
  }
  func.func @transform_3(%arg0: i32) -> (i32, i32) {
    %c0_i32 = arith.constant 0 : i32
    %c0_i32_0 = arith.constant 0 : i32
    %c0_i32_1 = arith.constant 0 : i32
    return %c0_i32, %c0_i32_0 : i32, i32
  }
  func.func @transform_4(%arg0: i32) -> (i32, i32) {
    %c0_i32 = arith.constant 0 : i32
    %c0_i32_0 = arith.constant 0 : i32
    return %arg0, %c0_i32 : i32, i32
  }
}

</mosaic_0001>

<llo_original>
// kernel: _forward_batched.1
$region0: #{_forward_batched.1}
  #allocation0 [shape = 'u32[]', space=smem, size = 0x4, offset = 0x4, fixed_abs, tag = 'smem constant byte address 0x4 - core index']
  #allocation1 [shape = 'u32[72,128]{1,0:T(1,128)}', space=vmem, size = 0x9000, scoped, tag = 'internal scratch']
  %s0 = inlined_call_operand.vmem [shape: f32[1,48,64], index: 0, kind: input, shape index: {}]
  %s1 = inlined_call_operand.vmem [shape: f32[1,48,64], index: 1, kind: input, shape index: {}]
  %s2 = inlined_call_operand.vmem [shape: f32[4,16], index: 2, kind: input, shape index: {}]
  %s3 = inlined_call_operand.vmem [shape: f32[64,16], index: 3, kind: input, shape index: {}]
  %s4 = inlined_call_operand.hbm [shape: f32[1,1], index: 4, kind: output, shape index: {}]
  %s5 = sld [smem:[#allocation0]]
  $region26: #{_forward_batched.1} parent=0
    _
  %s7 = ssub.s32 1, %s5
  %s8 = scalar_select 0, %s7, %s5
  $region1: #{_forward_batched.1} parent=0
    #allocation2 [shape = 'u8[512]{0}', space=smem, size = 0x200, scoped, tag = 'output window, operand 0, single buffered']
    #allocation3 [shape = 's32[1]{0}', space=sflag, size = 0x4, scoped, tag = 'scoped memory for _forward_batched.1']
    %9 = vsyncpa [#allocation3], 0
    // Predicated region
    $region2: #{_forward_batched.1} parent=1 // pred_check
      _
    $region3: #{_forward_batched.1} parent=1 // pred_check_branch
      %11 = sbr.rel (0) target = $region5
    $region4: #{_forward_batched.1} parent=1 // pred_region
      _
    $region5: #{_forward_batched.1} parent=1 // pred_fallthru
      _
    // Predicated region
    $region6: #{_forward_batched.1} parent=1 // pred_check
      _
    $region7: #{_forward_batched.1} parent=1 // pred_check_branch
      %13 = sbr.rel (0) target = $region9
    $region8: #{_forward_batched.1} parent=1 // pred_region
      _
    $region9: #{_forward_batched.1} parent=1 // pred_fallthru
      _
    // Predicated region
    $region10: #{_forward_batched.1} parent=1 // pred_check
      _
    $region11: #{_forward_batched.1} parent=1 // pred_check_branch
      %15 = sbr.rel (0) target = $region13
    $region12: #{_forward_batched.1} parent=1 // pred_region
      _
    $region13: #{_forward_batched.1} parent=1 // pred_fallthru
      _
    // Predicated region
    $region14: #{_forward_batched.1} parent=1 // pred_check
      _
    $region15: #{_forward_batched.1} parent=1 // pred_check_branch
      %17 = sbr.rel (0) target = $region17
    $region16: #{_forward_batched.1} parent=1 // pred_region
      _
    $region17: #{_forward_batched.1} parent=1 // pred_fallthru
      _
    %v18 = vld [vmem:[%s0] sm:$0xff]
    %v19 = vld [vmem:[%s0 + $0x8] sm:$0xff]
    %v20 = vld [vmem:[%s0 + $0x10] sm:$0xff]
    %v21 = vld [vmem:[%s0 + $0x18] sm:$0xff]
    %v22 = vld [vmem:[%s0 + $0x20] sm:$0xff]
    %v23 = vld [vmem:[%s0 + $0x28] sm:$0xff]
    %v24 = vld [vmem:[%s1] sm:$0xff]
    %v25 = vld [vmem:[%s1 + $0x8] sm:$0xff]
    %v26 = vld [vmem:[%s1 + $0x10] sm:$0xff]
    %v27 = vld [vmem:[%s1 + $0x18] sm:$0xff]
    %v28 = vld [vmem:[%s1 + $0x20] sm:$0xff]
    %v29 = vld [vmem:[%s1 + $0x28] sm:$0xff]
    %v30 = vld [vmem:[%s2] sm:$0xf]
    %v31 = vld [vmem:[%s3] sm:$0xff]
    %v32 = vld [vmem:[%s3 + $0x8] sm:$0xff]
    %v33 = vld [vmem:[%s3 + $0x10] sm:$0xff]
    %v34 = vld [vmem:[%s3 + $0x18] sm:$0xff]
    %v35 = vld [vmem:[%s3 + $0x20] sm:$0xff]
    %v36 = vld [vmem:[%s3 + $0x28] sm:$0xff]
    %v37 = vld [vmem:[%s3 + $0x30] sm:$0xff]
    %v38 = vld [vmem:[%s3 + $0x38] sm:$0xff]
    %v39 = vmul.f32 %v18, %v18
    %v40 = vmul.f32 %v19, %v19
    %v41 = vmul.f32 %v20, %v20
    %v42 = vmul.f32 %v21, %v21
    %v43 = vmul.f32 %v22, %v22
    %v44 = vmul.f32 %v23, %v23
    %v45 = vmul.f32 %v24, %v24
    %v46 = vmul.f32 %v25, %v25
    %v47 = vmul.f32 %v26, %v26
    %v48 = vmul.f32 %v27, %v27
    %v49 = vmul.f32 %v28, %v28
    %v50 = vmul.f32 %v29, %v29
    %v51 = vmul.f32 %v18, %v24
    %v52 = vmul.f32 %v19, %v25
    %v53 = vmul.f32 %v20, %v26
    %v54 = vmul.f32 %v21, %v27
    %v55 = vmul.f32 %v22, %v28
    %v56 = vmul.f32 %v23, %v29
    %vm57 = vcmask 523264
    %v59 = vsel %vm57, %v18, 0
    %v62 = vsel %vm57, %v19, 0
    %v65 = vsel %vm57, %v20, 0
    %v68 = vsel %vm57, %v21, 0
    %v71 = vsel %vm57, %v22, 0
    %v74 = vsel %vm57, %v23, 0
    %v77 = vsel %vm57, %v24, 0
    %v80 = vsel %vm57, %v25, 0
    %v83 = vsel %vm57, %v26, 0
    %v86 = vsel %vm57, %v27, 0
    %v89 = vsel %vm57, %v28, 0
    %v92 = vsel %vm57, %v29, 0
    %v95 = vsel %vm57, %v39, 0
    %v98 = vsel %vm57, %v40, 0
    %v101 = vsel %vm57, %v41, 0
    %v104 = vsel %vm57, %v42, 0
    %v107 = vsel %vm57, %v43, 0
    %v110 = vsel %vm57, %v44, 0
    %v113 = vsel %vm57, %v45, 0
    %v116 = vsel %vm57, %v46, 0
    %v119 = vsel %vm57, %v47, 0
    %v122 = vsel %vm57, %v48, 0
    %v125 = vsel %vm57, %v49, 0
    %v128 = vsel %vm57, %v50, 0
    %v131 = vsel %vm57, %v51, 0
    %v134 = vsel %vm57, %v52, 0
    %v137 = vsel %vm57, %v53, 0
    %v140 = vsel %vm57, %v54, 0
    %v143 = vsel %vm57, %v55, 0
    %v146 = vsel %vm57, %v56, 0
    %148 = vmatpush.msra.mxu0 0.0
    %149 = vmatpush.msra.mxu0 0.0
    %150 = vmatpush.msra.mxu0 0.0
    %151 = vmatpush.msra.mxu0 0.0
    %152 = vmatpush.msra.mxu0 0.0
    %153 = vmatpush.msra.mxu0 0.0
    %154 = vmatpush.msra.mxu0 0.0
    %155 = vmatpush.msra.mxu0 0.0
    %156 = vmatpush.msra.mxu0 %v38
    %157 = vmatpush.msra.mxu0 %v37
    %158 = vmatpush.msra.mxu0 %v36
    %159 = vmatpush.msra.mxu0 %v35
    %160 = vmatpush.msra.mxu0 %v34
    %161 = vmatpush.msra.mxu0 %v33
    %162 = vmatpush.msra.mxu0 %v32
    %163 = vmatpush.msra.mxu0 %v31
    %164 = vmatmul.f32.gmra.mxu0 %v59
    %v165 = vpop.f32.mrf.mxu0
    %v166 = vadd.f32 0.0, %v165
    %167 = vmatmul.f32.gmra.mxu0 %v62
    %v168 = vpop.f32.mrf.mxu0
    %v169 = vadd.f32 0.0, %v168
    %170 = vmatmul.f32.gmra.mxu0 %v65
    %v171 = vpop.f32.mrf.mxu0
    %v172 = vadd.f32 0.0, %v171
    %173 = vmatmul.f32.gmra.mxu0 %v68
    %v174 = vpop.f32.mrf.mxu0
    %v175 = vadd.f32 0.0, %v174
    %176 = vmatmul.f32.gmra.mxu0 %v71
    %v177 = vpop.f32.mrf.mxu0
    %v178 = vadd.f32 0.0, %v177
    %179 = vmatmul.f32.gmra.mxu0 %v74
    %v180 = vpop.f32.mrf.mxu0
    %v181 = vadd.f32 0.0, %v180
    %182 = vmatmul.f32.gmra.mxu0 %v77
    %v183 = vpop.f32.mrf.mxu0
    %v184 = vadd.f32 0.0, %v183
    %185 = vmatmul.f32.gmra.mxu0 %v80
    %v186 = vpop.f32.mrf.mxu0
    %v187 = vadd.f32 0.0, %v186
    %188 = vmatmul.f32.gmra.mxu0 %v83
    %v189 = vpop.f32.mrf.mxu0
    %v190 = vadd.f32 0.0, %v189
    %191 = vmatmul.f32.gmra.mxu0 %v86
    %v192 = vpop.f32.mrf.mxu0
    %v193 = vadd.f32 0.0, %v192
    %194 = vmatmul.f32.gmra.mxu0 %v89
    %v195 = vpop.f32.mrf.mxu0
    %v196 = vadd.f32 0.0, %v195
    %197 = vmatmul.f32.gmra.mxu0 %v92
    %v198 = vpop.f32.mrf.mxu0
    %v199 = vadd.f32 0.0, %v198
    %200 = vmatmul.f32.gmra.mxu0 %v95
    %v201 = vpop.f32.mrf.mxu0
    %v202 = vadd.f32 0.0, %v201
    %203 = vmatmul.f32.gmra.mxu0 %v98
    %v204 = vpop.f32.mrf.mxu0
    %v205 = vadd.f32 0.0, %v204
    %206 = vmatmul.f32.gmra.mxu0 %v101
    %v207 = vpop.f32.mrf.mxu0
    %v208 = vadd.f32 0.0, %v207
    %209 = vmatmul.f32.gmra.mxu0 %v104
    %v210 = vpop.f32.mrf.mxu0
    %v211 = vadd.f32 0.0, %v210
    %212 = vmatmul.f32.gmra.mxu0 %v107
    %v213 = vpop.f32.mrf.mxu0
    %v214 = vadd.f32 0.0, %v213
    %215 = vmatmul.f32.gmra.mxu0 %v110
    %v216 = vpop.f32.mrf.mxu0
    %v217 = vadd.f32 0.0, %v216
    %218 = vmatmul.f32.gmra.mxu0 %v113
    %v219 = vpop.f32.mrf.mxu0
    %v220 = vadd.f32 0.0, %v219
    %221 = vmatmul.f32.gmra.mxu0 %v116
    %v222 = vpop.f32.mrf.mxu0
    %v223 = vadd.f32 0.0, %v222
    %224 = vmatmul.f32.gmra.mxu0 %v119
    %v225 = vpop.f32.mrf.mxu0
    %v226 = vadd.f32 0.0, %v225
    %227 = vmatmul.f32.gmra.mxu0 %v122
    %v228 = vpop.f32.mrf.mxu0
    %v229 = vadd.f32 0.0, %v228
    %230 = vmatmul.f32.gmra.mxu0 %v125
    %v231 = vpop.f32.mrf.mxu0
    %v232 = vadd.f32 0.0, %v231
    %233 = vmatmul.f32.gmra.mxu0 %v128
    %v234 = vpop.f32.mrf.mxu0
    %v235 = vadd.f32 0.0, %v234
    %236 = vmatmul.f32.gmra.mxu0 %v131
    %v237 = vpop.f32.mrf.mxu0
    %v238 = vadd.f32 0.0, %v237
    %239 = vmatmul.f32.gmra.mxu0 %v134
    %v240 = vpop.f32.mrf.mxu0
    %v241 = vadd.f32 0.0, %v240
    %242 = vmatmul.f32.gmra.mxu0 %v137
    %v243 = vpop.f32.mrf.mxu0
    %v244 = vadd.f32 0.0, %v243
    %245 = vmatmul.f32.gmra.mxu0 %v140
    %v246 = vpop.f32.mrf.mxu0
    %v247 = vadd.f32 0.0, %v246
    %248 = vmatmul.f32.gmra.mxu0 %v143
    %v249 = vpop.f32.mrf.mxu0
    %v250 = vadd.f32 0.0, %v249
    %251 = vmatmul.f32.gmra.mxu0 %v146
    %v252 = vpop.f32.mrf.mxu0
    %v253 = vadd.f32 0.0, %v252
    %254 = vdwg.mxu0
    %vm255 = vcmask 130048
    %v257 = vsel %vm255, %v30, 0
    %259 = vmatpush.msra.mxu0 0.0
    %260 = vmatpush.msra.mxu0 0.0
    %261 = vmatpush.msra.mxu0 0.0
    %262 = vmatpush.msra.mxu0 0.0
    %263 = vmatpush.msra.mxu0 0.0
    %264 = vmatpush.msra.mxu0 0.0
    %265 = vmatpush.msra.mxu0 0.0
    %266 = vmatpush.msra.mxu0 0.0
    %267 = vmatpush.msra.mxu0 0.0
    %268 = vmatpush.msra.mxu0 0.0
    %269 = vmatpush.msra.mxu0 0.0
    %270 = vmatpush.msra.mxu0 0.0
    %271 = vmatpush.msra.mxu0 0.0
    %272 = vmatpush.msra.mxu0 0.0
    %273 = vmatpush.msra.mxu0 %v169
    %274 = vmatpush.msra.mxu0 %v166
    %275 = vmatmul.f32.gmra.mxu0 %v257
    %v276 = vpop.f32.mrf.mxu0
    %v277 = vadd.f32 0.0, %v276
    %278 = vdwg.mxu0
    %279 = vmatpush.msra.mxu0 0.0
    %280 = vmatpush.msra.mxu0 0.0
    %281 = vmatpush.msra.mxu0 0.0
    %282 = vmatpush.msra.mxu0 0.0
    %283 = vmatpush.msra.mxu0 0.0
    %284 = vmatpush.msra.mxu0 0.0
    %285 = vmatpush.msra.mxu0 0.0
    %286 = vmatpush.msra.mxu0 0.0
    %287 = vmatpush.msra.mxu0 0.0
    %288 = vmatpush.msra.mxu0 0.0
    %289 = vmatpush.msra.mxu0 0.0
    %290 = vmatpush.msra.mxu0 0.0
    %291 = vmatpush.msra.mxu0 0.0
    %292 = vmatpush.msra.mxu0 0.0
    %293 = vmatpush.msra.mxu0 %v187
    %294 = vmatpush.msra.mxu0 %v184
    %295 = vmatmul.f32.gmra.mxu0 %v257
    %v296 = vpop.f32.mrf.mxu0
    %v297 = vadd.f32 0.0, %v296
    %298 = vdwg.mxu0
    %299 = vmatpush.msra.mxu0 0.0
    %300 = vmatpush.msra.mxu0 0.0
    %301 = vmatpush.msra.mxu0 0.0
    %302 = vmatpush.msra.mxu0 0.0
    %303 = vmatpush.msra.mxu0 0.0
    %304 = vmatpush.msra.mxu0 0.0
    %305 = vmatpush.msra.mxu0 0.0
    %306 = vmatpush.msra.mxu0 0.0
    %307 = vmatpush.msra.mxu0 0.0
    %308 = vmatpush.msra.mxu0 0.0
    %309 = vmatpush.msra.mxu0 0.0
    %310 = vmatpush.msra.mxu0 0.0
    %311 = vmatpush.msra.mxu0 0.0
    %312 = vmatpush.msra.mxu0 0.0
    %313 = vmatpush.msra.mxu0 %v205
    %314 = vmatpush.msra.mxu0 %v202
    %315 = vmatmul.f32.gmra.mxu0 %v257
    %v316 = vpop.f32.mrf.mxu0
    %v317 = vadd.f32 0.0, %v316
    %318 = vdwg.mxu0
    %319 = vmatpush.msra.mxu0 0.0
    %320 = vmatpush.msra.mxu0 0.0
    %321 = vmatpush.msra.mxu0 0.0
    %322 = vmatpush.msra.mxu0 0.0
    %323 = vmatpush.msra.mxu0 0.0
    %324 = vmatpush.msra.mxu0 0.0
    %325 = vmatpush.msra.mxu0 0.0
    %326 = vmatpush.msra.mxu0 0.0
    %327 = vmatpush.msra.mxu0 0.0
    %328 = vmatpush.msra.mxu0 0.0
    %329 = vmatpush.msra.mxu0 0.0
    %330 = vmatpush.msra.mxu0 0.0
    %331 = vmatpush.msra.mxu0 0.0
    %332 = vmatpush.msra.mxu0 0.0
    %333 = vmatpush.msra.mxu0 %v223
    %334 = vmatpush.msra.mxu0 %v220
    %335 = vmatmul.f32.gmra.mxu0 %v257
    %v336 = vpop.f32.mrf.mxu0
    %v337 = vadd.f32 0.0, %v336
    %338 = vdwg.mxu0
    %339 = vmatpush.msra.mxu0 0.0
    %340 = vmatpush.msra.mxu0 0.0
    %341 = vmatpush.msra.mxu0 0.0
    %342 = vmatpush.msra.mxu0 0.0
    %343 = vmatpush.msra.mxu0 0.0
    %344 = vmatpush.msra.mxu0 0.0
    %345 = vmatpush.msra.mxu0 0.0
    %346 = vmatpush.msra.mxu0 0.0
    %347 = vmatpush.msra.mxu0 0.0
    %348 = vmatpush.msra.mxu0 0.0
    %349 = vmatpush.msra.mxu0 0.0
    %350 = vmatpush.msra.mxu0 0.0
    %351 = vmatpush.msra.mxu0 0.0
    %352 = vmatpush.msra.mxu0 0.0
    %353 = vmatpush.msra.mxu0 %v241
    %354 = vmatpush.msra.mxu0 %v238
    %355 = vmatmul.f32.gmra.mxu0 %v257
    %v356 = vpop.f32.mrf.mxu0
    %v357 = vadd.f32 0.0, %v356
    %358 = vdwg.mxu0
    %v359 = vmul.f32 %v277, %v277
    %v360 = vmul.f32 %v297, %v297
    %v361 = vmul.f32 %v277, %v297
    %v362 = vmul.f32 %v361, 2.0
    %v363 = vadd.f32 %v362, 0.0001
    %v364 = vsub.f32 %v357, %v361
    %v365 = vmul.f32 %v364, 2.0
    %v366 = vadd.f32 %v365, 0.0009
    %v367 = vmul.f32 %v363, %v366
    %v368 = vadd.f32 %v359, %v360
    %v369 = vadd.f32 %v368, 0.0001
    %v370 = vsub.f32 %v317, %v359
    %v371 = vsub.f32 %v337, %v360
    %v372 = vadd.f32 %v370, %v371
    %v373 = vadd.f32 %v372, 0.0009
    %v374 = vmul.f32 %v369, %v373
    %v375 = vrcp.pop %v374
    %v376 = vmul.f32 %v374, %v375
    %v377 = vsub.f32 1.0, %v376
    %v378 = vmul.f32 %v375, %v377
    %v379 = vadd.f32 %v375, %v378
    %vm380 = vweird.f32 %v374
    %vm381 = vweird.f32 %v375
    %vm382 = vmor %vm380, %vm381
    %v383 = vsel %vm382, %v375, %v379
    %v384 = vand.u32 2147483647, %v374
    %vm385 = vcmp.eq.f32.partialorder %v384, 8.507059e+37
    %v386 = vand.u32 %v374, 2147483648
    %v387 = vor.u32 1.1754944e-38, %v386
    %v388 = vsel %vm385, %v387, %v383
    %v389 = vmul.f32 %v367, %v388
    %vm390 = vcmask 125952
    %v391 = vsel %vm390, %v389, 0.0
    %392 = vadd.xlane.f32.xlu0 %v391
    %v393 = vpop.xlane.xlu0 %392
    %v394 = vrot.slane %v393, 4
    %v395 = vadd.f32 %v393, %v394
    %v396 = vrot.slane %v395, 2
    %v397 = vadd.f32 %v395, %v396
    %v398 = vrot.slane %v397, 1
    %v399 = vadd.f32 %v397, %v398
    %s400 = vtos %v399
    %s401 = sadd.f32 %s400, 0.0
    %402 = vmatpush.msra.mxu0 0.0
    %403 = vmatpush.msra.mxu0 0.0
    %404 = vmatpush.msra.mxu0 0.0
    %405 = vmatpush.msra.mxu0 0.0
    %406 = vmatpush.msra.mxu0 0.0
    %407 = vmatpush.msra.mxu0 0.0
    %408 = vmatpush.msra.mxu0 0.0
    %409 = vmatpush.msra.mxu0 0.0
    %410 = vmatpush.msra.mxu0 0.0
    %411 = vmatpush.msra.mxu0 0.0
    %412 = vmatpush.msra.mxu0 0.0
    %413 = vmatpush.msra.mxu0 0.0
    %414 = vmatpush.msra.mxu0 0.0
    %415 = vmatpush.msra.mxu0 0.0
    %416 = vmatpush.msra.mxu0 %v175
    %417 = vmatpush.msra.mxu0 %v172
    %418 = vmatmul.f32.gmra.mxu0 %v257
    %v419 = vpop.f32.mrf.mxu0
    %v420 = vadd.f32 0.0, %v419
    %421 = vdwg.mxu0
    %422 = vmatpush.msra.mxu0 0.0
    %423 = vmatpush.msra.mxu0 0.0
    %424 = vmatpush.msra.mxu0 0.0
    %425 = vmatpush.msra.mxu0 0.0
    %426 = vmatpush.msra.mxu0 0.0
    %427 = vmatpush.msra.mxu0 0.0
    %428 = vmatpush.msra.mxu0 0.0
    %429 = vmatpush.msra.mxu0 0.0
    %430 = vmatpush.msra.mxu0 0.0
    %431 = vmatpush.msra.mxu0 0.0
    %432 = vmatpush.msra.mxu0 0.0
    %433 = vmatpush.msra.mxu0 0.0
    %434 = vmatpush.msra.mxu0 0.0
    %435 = vmatpush.msra.mxu0 0.0
    %436 = vmatpush.msra.mxu0 %v193
    %437 = vmatpush.msra.mxu0 %v190
    %438 = vmatmul.f32.gmra.mxu0 %v257
    %v439 = vpop.f32.mrf.mxu0
    %v440 = vadd.f32 0.0, %v439
    %441 = vdwg.mxu0
    %442 = vmatpush.msra.mxu0 0.0
    %443 = vmatpush.msra.mxu0 0.0
    %444 = vmatpush.msra.mxu0 0.0
    %445 = vmatpush.msra.mxu0 0.0
    %446 = vmatpush.msra.mxu0 0.0
    %447 = vmatpush.msra.mxu0 0.0
    %448 = vmatpush.msra.mxu0 0.0
    %449 = vmatpush.msra.mxu0 0.0
    %450 = vmatpush.msra.mxu0 0.0
    %451 = vmatpush.msra.mxu0 0.0
    %452 = vmatpush.msra.mxu0 0.0
    %453 = vmatpush.msra.mxu0 0.0
    %454 = vmatpush.msra.mxu0 0.0
    %455 = vmatpush.msra.mxu0 0.0
    %456 = vmatpush.msra.mxu0 %v211
    %457 = vmatpush.msra.mxu0 %v208
    %458 = vmatmul.f32.gmra.mxu0 %v257
    %v459 = vpop.f32.mrf.mxu0
    %v460 = vadd.f32 0.0, %v459
    %461 = vdwg.mxu0
    %462 = vmatpush.msra.mxu0 0.0
    %463 = vmatpush.msra.mxu0 0.0
    %464 = vmatpush.msra.mxu0 0.0
    %465 = vmatpush.msra.mxu0 0.0
    %466 = vmatpush.msra.mxu0 0.0
    %467 = vmatpush.msra.mxu0 0.0
    %468 = vmatpush.msra.mxu0 0.0
    %469 = vmatpush.msra.mxu0 0.0
    %470 = vmatpush.msra.mxu0 0.0
    %471 = vmatpush.msra.mxu0 0.0
    %472 = vmatpush.msra.mxu0 0.0
    %473 = vmatpush.msra.mxu0 0.0
    %474 = vmatpush.msra.mxu0 0.0
    %475 = vmatpush.msra.mxu0 0.0
    %476 = vmatpush.msra.mxu0 %v229
    %477 = vmatpush.msra.mxu0 %v226
    %478 = vmatmul.f32.gmra.mxu0 %v257
    %v479 = vpop.f32.mrf.mxu0
    %v480 = vadd.f32 0.0, %v479
    %481 = vdwg.mxu0
    %482 = vmatpush.msra.mxu0 0.0
    %483 = vmatpush.msra.mxu0 0.0
    %484 = vmatpush.msra.mxu0 0.0
    %485 = vmatpush.msra.mxu0 0.0
    %486 = vmatpush.msra.mxu0 0.0
    %487 = vmatpush.msra.mxu0 0.0
    %488 = vmatpush.msra.mxu0 0.0
    %489 = vmatpush.msra.mxu0 0.0
    %490 = vmatpush.msra.mxu0 0.0
    %491 = vmatpush.msra.mxu0 0.0
    %492 = vmatpush.msra.mxu0 0.0
    %493 = vmatpush.msra.mxu0 0.0
    %494 = vmatpush.msra.mxu0 0.0
    %495 = vmatpush.msra.mxu0 0.0
    %496 = vmatpush.msra.mxu0 %v247
    %497 = vmatpush.msra.mxu0 %v244
    %498 = vmatmul.f32.gmra.mxu0 %v257
    %v499 = vpop.f32.mrf.mxu0
    %v500 = vadd.f32 0.0, %v499
    %501 = vdwg.mxu0
    %v502 = vmul.f32 %v420, %v420
    %v503 = vmul.f32 %v440, %v440
    %v504 = vmul.f32 %v420, %v440
    %v505 = vmul.f32 %v504, 2.0
    %v506 = vadd.f32 %v505, 0.0001
    %v507 = vsub.f32 %v500, %v504
    %v508 = vmul.f32 %v507, 2.0
    %v509 = vadd.f32 %v508, 0.0009
    %v510 = vmul.f32 %v506, %v509
    %v511 = vadd.f32 %v502, %v503
    %v512 = vadd.f32 %v511, 0.0001
    %v513 = vsub.f32 %v460, %v502
    %v514 = vsub.f32 %v480, %v503
    %v515 = vadd.f32 %v513, %v514
    %v516 = vadd.f32 %v515, 0.0009
    %v517 = vmul.f32 %v512, %v516
    %v518 = vrcp.pop %v517
    %v519 = vmul.f32 %v517, %v518
    %v520 = vsub.f32 1.0, %v519
    %v521 = vmul.f32 %v518, %v520
    %v522 = vadd.f32 %v518, %v521
    %vm523 = vweird.f32 %v517
    %vm524 = vweird.f32 %v518
    %vm525 = vmor %vm523, %vm524
    %v526 = vsel %vm525, %v518, %v522
    %v527 = vand.u32 2147483647, %v517
    %vm528 = vcmp.eq.f32.partialorder %v527, 8.507059e+37
    %v529 = vand.u32 %v517, 2147483648
    %v530 = vor.u32 1.1754944e-38, %v529
    %v531 = vsel %vm528, %v530, %v526
    %v532 = vmul.f32 %v510, %v531
    %v533 = vsel %vm390, %v532, 0.0
    %534 = vadd.xlane.f32.xlu0 %v533
    %v535 = vpop.xlane.xlu0 %534
    %v536 = vrot.slane %v535, 4
    %v537 = vadd.f32 %v535, %v536
    %v538 = vrot.slane %v537, 2
    %v539 = vadd.f32 %v537, %v538
    %v540 = vrot.slane %v539, 1
    %v541 = vadd.f32 %v539, %v540
    %s542 = vtos %v541
    %s543 = sadd.f32 %s401, %s542
    %544 = vmatpush.msra.mxu0 0.0
    %545 = vmatpush.msra.mxu0 0.0
    %546 = vmatpush.msra.mxu0 0.0
    %547 = vmatpush.msra.mxu0 0.0
    %548 = vmatpush.msra.mxu0 0.0
    %549 = vmatpush.msra.mxu0 0.0
    %550 = vmatpush.msra.mxu0 0.0
    %551 = vmatpush.msra.mxu0 0.0
    %552 = vmatpush.msra.mxu0 0.0
    %553 = vmatpush.msra.mxu0 0.0
    %554 = vmatpush.msra.mxu0 0.0
    %555 = vmatpush.msra.mxu0 0.0
    %556 = vmatpush.msra.mxu0 0.0
    %557 = vmatpush.msra.mxu0 0.0
    %558 = vmatpush.msra.mxu0 %v181
    %559 = vmatpush.msra.mxu0 %v178
    %560 = vmatmul.f32.gmra.mxu0 %v257
    %v561 = vpop.f32.mrf.mxu0
    %v562 = vadd.f32 0.0, %v561
    %563 = vdwg.mxu0
    %564 = vmatpush.msra.mxu0 0.0
    %565 = vmatpush.msra.mxu0 0.0
    %566 = vmatpush.msra.mxu0 0.0
    %567 = vmatpush.msra.mxu0 0.0
    %568 = vmatpush.msra.mxu0 0.0
    %569 = vmatpush.msra.mxu0 0.0
    %570 = vmatpush.msra.mxu0 0.0
    %571 = vmatpush.msra.mxu0 0.0
    %572 = vmatpush.msra.mxu0 0.0
    %573 = vmatpush.msra.mxu0 0.0
    %574 = vmatpush.msra.mxu0 0.0
    %575 = vmatpush.msra.mxu0 0.0
    %576 = vmatpush.msra.mxu0 0.0
    %577 = vmatpush.msra.mxu0 0.0
    %578 = vmatpush.msra.mxu0 %v199
    %579 = vmatpush.msra.mxu0 %v196
    %580 = vmatmul.f32.gmra.mxu0 %v257
    %v581 = vpop.f32.mrf.mxu0
    %v582 = vadd.f32 0.0, %v581
    %583 = vdwg.mxu0
    %584 = vmatpush.msra.mxu0 0.0
    %585 = vmatpush.msra.mxu0 0.0
    %586 = vmatpush.msra.mxu0 0.0
    %587 = vmatpush.msra.mxu0 0.0
    %588 = vmatpush.msra.mxu0 0.0
    %589 = vmatpush.msra.mxu0 0.0
    %590 = vmatpush.msra.mxu0 0.0
    %591 = vmatpush.msra.mxu0 0.0
    %592 = vmatpush.msra.mxu0 0.0
    %593 = vmatpush.msra.mxu0 0.0
    %594 = vmatpush.msra.mxu0 0.0
    %595 = vmatpush.msra.mxu0 0.0
    %596 = vmatpush.msra.mxu0 0.0
    %597 = vmatpush.msra.mxu0 0.0
    %598 = vmatpush.msra.mxu0 %v217
    %599 = vmatpush.msra.mxu0 %v214
    %600 = vmatmul.f32.gmra.mxu0 %v257
    %v601 = vpop.f32.mrf.mxu0
    %v602 = vadd.f32 0.0, %v601
    %603 = vdwg.mxu0
    %604 = vmatpush.msra.mxu0 0.0
    %605 = vmatpush.msra.mxu0 0.0
    %606 = vmatpush.msra.mxu0 0.0
    %607 = vmatpush.msra.mxu0 0.0
    %608 = vmatpush.msra.mxu0 0.0
    %609 = vmatpush.msra.mxu0 0.0
    %610 = vmatpush.msra.mxu0 0.0
    %611 = vmatpush.msra.mxu0 0.0
    %612 = vmatpush.msra.mxu0 0.0
    %613 = vmatpush.msra.mxu0 0.0
    %614 = vmatpush.msra.mxu0 0.0
    %615 = vmatpush.msra.mxu0 0.0
    %616 = vmatpush.msra.mxu0 0.0
    %617 = vmatpush.msra.mxu0 0.0
    %618 = vmatpush.msra.mxu0 %v235
    %619 = vmatpush.msra.mxu0 %v232
    %620 = vmatmul.f32.gmra.mxu0 %v257
    %v621 = vpop.f32.mrf.mxu0
    %v622 = vadd.f32 0.0, %v621
    %623 = vdwg.mxu0
    %624 = vmatpush.msra.mxu0 0.0
    %625 = vmatpush.msra.mxu0 0.0
    %626 = vmatpush.msra.mxu0 0.0
    %627 = vmatpush.msra.mxu0 0.0
    %628 = vmatpush.msra.mxu0 0.0
    %629 = vmatpush.msra.mxu0 0.0
    %630 = vmatpush.msra.mxu0 0.0
    %631 = vmatpush.msra.mxu0 0.0
    %632 = vmatpush.msra.mxu0 0.0
    %633 = vmatpush.msra.mxu0 0.0
    %634 = vmatpush.msra.mxu0 0.0
    %635 = vmatpush.msra.mxu0 0.0
    %636 = vmatpush.msra.mxu0 0.0
    %637 = vmatpush.msra.mxu0 0.0
    %638 = vmatpush.msra.mxu0 %v253
    %639 = vmatpush.msra.mxu0 %v250
    %640 = vmatmul.f32.gmra.mxu0 %v257
    %v641 = vpop.f32.mrf.mxu0
    %v642 = vadd.f32 0.0, %v641
    %643 = vdwg.mxu0
    %v644 = vmul.f32 %v562, %v562
    %v645 = vmul.f32 %v582, %v582
    %v646 = vmul.f32 %v562, %v582
    %v647 = vmul.f32 %v646, 2.0
    %v648 = vadd.f32 %v647, 0.0001
    %v649 = vsub.f32 %v642, %v646
    %v650 = vmul.f32 %v649, 2.0
    %v651 = vadd.f32 %v650, 0.0009
    %v652 = vmul.f32 %v648, %v651
    %v653 = vadd.f32 %v644, %v645
    %v654 = vadd.f32 %v653, 0.0001
    %v655 = vsub.f32 %v602, %v644
    %v656 = vsub.f32 %v622, %v645
    %v657 = vadd.f32 %v655, %v656
    %v658 = vadd.f32 %v657, 0.0009
    %v659 = vmul.f32 %v654, %v658
    %v660 = vrcp.pop %v659
    %v661 = vmul.f32 %v659, %v660
    %v662 = vsub.f32 1.0, %v661
    %v663 = vmul.f32 %v660, %v662
    %v664 = vadd.f32 %v660, %v663
    %vm665 = vweird.f32 %v659
    %vm666 = vweird.f32 %v660
    %vm667 = vmor %vm665, %vm666
    %v668 = vsel %vm667, %v660, %v664
    %v669 = vand.u32 2147483647, %v659
    %vm670 = vcmp.eq.f32.partialorder %v669, 8.507059e+37
    %v671 = vand.u32 %v659, 2147483648
    %v672 = vor.u32 1.1754944e-38, %v671
    %v673 = vsel %vm670, %v672, %v668
    %v674 = vmul.f32 %v652, %v673
    %v675 = vsel %vm390, %v674, 0.0
    %676 = vadd.xlane.f32.xlu0 %v675
    %v677 = vpop.xlane.xlu0 %676
    %v678 = vrot.slane %v677, 4
    %v679 = vadd.f32 %v677, %v678
    %v680 = vrot.slane %v679, 2
    %v681 = vadd.f32 %v679, %v680
    %v682 = vrot.slane %v681, 1
    %v683 = vadd.f32 %v681, %v682
    %s684 = vtos %v683
    %s685 = sadd.f32 %s543, %s684
    %s686 = smul.f32 %s685, 0.0052083335
    %s687 = ssub.f32 1.0, %s686
    %s688 = scalar_lea.smem [#allocation2], 0
    %689 = sst [smem:[%s688]] %s687
    // Predicated region
    $region18: #{_forward_batched.1} parent=1 // pred_check
      _
    $region19: #{_forward_batched.1} parent=1 // pred_check_branch
      %691 = sbr.rel (0) target = $region21
    $region20: #{_forward_batched.1} parent=1 // pred_region
      %693 = vsyncadd [#allocation3], 0
      %s695 = sshll.u32 %s4, 4
      %s696 = int_to_ptr.hbm [resolvable:$true] %s695
      %698 = dma.smem_to_hbm [#allocation2], 16, %s696, [#allocation3]
    $region21: #{_forward_batched.1} parent=1 // pred_fallthru
      _
    // Predicated region
    $region22: #{_forward_batched.1} parent=1 // pred_check
      _
    $region23: #{_forward_batched.1} parent=1 // pred_check_branch
      %700 = sbr.rel (0) target = $region25
    $region24: #{_forward_batched.1} parent=1 // pred_region
      %702 = dma.done [#allocation3], 16
    $region25: #{_forward_batched.1} parent=1 // pred_fallthru
      _
    %703 = sfence
    %704 = vsyncpa [#allocation3], 1

</llo_original>
